<compile_context>
chip_gen: v7x
topology: tpu7x:2x2x1
jax: 0.10.0
libtpu: 0.0.40
codegen_flags: <defaults>
</compile_context>

<pallas_src>
import functools

import jax
import jax.numpy as jnp
from jax.experimental import pallas as pl
from jax.experimental.pallas import tpu as pltpu


def _l2norm_kernel(x_ref, o_ref, *, eps: float):
    # Per-row sum of squares in f32, then one EUP rsqrt per row and a VPU multiply.
    x = x_ref[...]
    xf = x.astype(jnp.float32)
    ssq = jnp.sum(xf * xf, axis=-1, keepdims=True)                  # (tb, 1) f32
    # x / max(sqrt(ssq), eps) == x * rsqrt(max(ssq, eps^2))
    inv = jax.lax.rsqrt(jnp.maximum(ssq, jnp.float32(eps) * jnp.float32(eps)))
    o_ref[...] = (xf * inv).astype(o_ref.dtype)
    # TODO(synk): for bf16/int8 inputs, keep the store path unpromoted (multiply in
    # input dtype) to halve vreg pressure; f32 path here is exact for the demo.


def _row_multiple(dtype) -> int:
    # Native sublane packing: 8 rows per vreg for 32-bit, 16 for 16-bit, 32 for 8-bit.
    itemsize = jnp.dtype(dtype).itemsize
    return max(8, 32 // max(itemsize, 1))


def l2_normalize(x: jax.Array, eps: float = 1e-12, block_rows: int | None = None) -> jax.Array:
    """L2-normalize along the last (feature) axis; matches F.normalize(x, 2, dim=1, eps)."""
    B, D = x.shape
    itemsize = jnp.dtype(x.dtype).itemsize
    mult = _row_multiple(x.dtype)

    if block_rows is None:
        # Target ~4 MiB per tile buffer => ~16 MiB total for double-buffered in+out.
        # Large enough to sit at the HBM roofline, small enough for v7x's 64 MiB VMEM.
        tile_budget_bytes = 4 * 1024 * 1024
        row_bytes = D * itemsize
        block_rows = max(tile_budget_bytes // max(row_bytes, 1), mult)
        block_rows = (block_rows // mult) * mult
        # Don't allocate more rows than the (padded) batch needs.
        b_padded = ((B + mult - 1) // mult) * mult
        block_rows = min(block_rows, b_padded)
        block_rows = max(block_rows, mult)

    kernel = functools.partial(_l2norm_kernel, eps=eps)
    grid = (pl.cdiv(B, block_rows),)  # partial tail block is masked by Pallas

    return pl.pallas_call(
        kernel,
        out_shape=jax.ShapeDtypeStruct((B, D), x.dtype),
        grid_spec=pltpu.PrefetchScalarGridSpec(
            num_scalar_prefetch=0,
            grid=grid,
            in_specs=[pl.BlockSpec((block_rows, D), lambda i: (i, 0))],
            out_specs=pl.BlockSpec((block_rows, D), lambda i: (i, 0)),
        ),
        compiler_params=pltpu.CompilerParams(
            dimension_semantics=("parallel",),
            vmem_limit_bytes=32 * 1024 * 1024,
        ),
    )(x)


def _reference(x, eps=1e-12):
    norm = jnp.sqrt(jnp.sum(x.astype(jnp.float32) ** 2, axis=1, keepdims=True))
    return (x.astype(jnp.float32) / jnp.maximum(norm, eps)).astype(x.dtype)


if __name__ == "__main__":
    key = jax.random.PRNGKey(0)

    # Small, tile-friendly shape.
    B, D = 16, 256
    x = jax.random.normal(key, (B, D), dtype=jnp.float32)
    out = jax.block_until_ready(l2_normalize(x))
    ref = _reference(x)
    assert out.shape == (B, D)
    assert jnp.allclose(out, ref, atol=1e-5, rtol=1e-5), "mismatch vs reference (divisible B)"

    # Ragged batch: exercises the cdiv grid + masked tail block.
    B2 = 13
    x2 = jax.random.normal(jax.random.PRNGKey(1), (B2, D), dtype=jnp.float32)
    out2 = jax.block_until_ready(l2_normalize(x2))
    ref2 = _reference(x2)
    assert out2.shape == (B2, D)
    assert jnp.allclose(out2, ref2, atol=1e-5, rtol=1e-5), "mismatch vs reference (ragged B)"

    print("KERNEL_OK")
</pallas_src>

<mosaic_0001>
module attributes {stable_mosaic.version = 11 : i64} {
  func.func @_l2norm_kernel(%arg0: i32, %arg1: memref<16x256xf32, #tpu.memory_space<vmem>>, %arg2: memref<16x256xf32, #tpu.memory_space<vmem>>) attributes {dimension_semantics = [#tpu.dimension_semantics<parallel>], iteration_bounds = array<i64: 1>, scalar_prefetch = 0 : i64, scratch_operands = 0 : i64, tpu.core_type = #tpu.core_type<tc>, window_params = [{transform_indices = @transform_0, window_bounds = array<i64: 16, 256>}, {transform_indices = @transform_1, window_bounds = array<i64: 16, 256>}]} {
    %c0 = arith.constant 0 : index
    %c0_0 = arith.constant 0 : index
    %0 = vector.load %arg1[%c0, %c0_0] : memref<16x256xf32, #tpu.memory_space<vmem>>, vector<16x256xf32>
    %1 = arith.mulf %0, %0 : vector<16x256xf32>
    %cst = arith.constant dense<0.000000e+00> : vector<16xf32>
    %2 = vector.multi_reduction <add>, %1, %cst [1] : vector<16x256xf32> to vector<16xf32>
    %3 = vector.shape_cast %2 : vector<16xf32> to vector<16x1xf32>
    %cst_1 = arith.constant 9.99999996E-13 : f32
    %cst_2 = arith.constant 9.99999996E-13 : f32
    %4 = arith.mulf %cst_1, %cst_2 : f32
    %5 = vector.broadcast %4 : f32 to vector<16x1xf32>
    %6 = arith.maximumf %3, %5 : vector<16x1xf32>
    %7 = math.rsqrt %6 : vector<16x1xf32>
    %8 = vector.broadcast %7 : vector<16x1xf32> to vector<16x256xf32>
    %9 = arith.mulf %0, %8 : vector<16x256xf32>
    %c0_3 = arith.constant 0 : index
    %c0_4 = arith.constant 0 : index
    %10 = vector.load %arg2[%c0_3, %c0_4] : memref<16x256xf32, #tpu.memory_space<vmem>>, vector<16x256xf32>
    tpu.vector_store %arg2[%c0_3, %c0_4], %9 {strides = array<i32>} : memref<16x256xf32, #tpu.memory_space<vmem>>, vector<16x256xf32>,
    return
  }
  func.func @transform_0(%arg0: i32) -> (i32, i32) {
    %c0_i32 = arith.constant 0 : i32
    %c0_i32_0 = arith.constant 0 : i32
    return %arg0, %c0_i32 : i32, i32
  }
  func.func @transform_1(%arg0: i32) -> (i32, i32) {
    %c0_i32 = arith.constant 0 : i32
    %c0_i32_0 = arith.constant 0 : i32
    return %arg0, %c0_i32 : i32, i32
  }
}

</mosaic_0001>

<llo_original>
// kernel: tpu_custom_call.1
$region0: #{tpu_custom_call.1}
  #allocation0 [shape = 'u32[]', space=smem, size = 0x4, offset = 0x4, fixed_abs, tag = 'smem constant byte address 0x4 - core index']
  #allocation1 [shape = 'u32[144,128]{1,0:T(1,128)}', space=vmem, size = 0x12000, scoped, tag = 'internal scratch']
  %s0 = inlined_call_operand.hbm [shape: f32[16,256], index: 0, kind: input, shape index: {}]
  %s1 = inlined_call_operand.hbm [shape: f32[16,256], index: 1, kind: output, shape index: {}]
  %s2 = sld [smem:[#allocation0]]
  $region18: #{tpu_custom_call.1} parent=0
    _
  %s4 = ssub.s32 1, %s2
  %s5 = scalar_select 0, %s4, %s2
  $region1: #{tpu_custom_call.1} parent=0
    #allocation2 [shape = 'u8[16384]{0}', space=vmem, size = 0x4000, scoped, tag = 'input window, operand 0, single buffered']
    #allocation3 [shape = 's32[1]{0}', space=sflag, size = 0x4, scoped, tag = 'scoped memory for tpu_custom_call.1']
    #allocation4 [shape = 's32[1]{0}', space=sflag, size = 0x4, scoped, tag = 'scoped memory for tpu_custom_call.1']
    #allocation5 [shape = 'u8[16384]{0}', space=vmem, size = 0x4000, scoped, tag = 'output window, operand 0, single buffered']
    %6 = vsyncpa [#allocation3], 0
    %7 = vsyncpa [#allocation4], 0
    // Predicated region
    $region2: #{tpu_custom_call.1} parent=1 // pred_check
      _
    $region3: #{tpu_custom_call.1} parent=1 // pred_check_branch
      %9 = sbr.rel (0) target = $region5
    $region4: #{tpu_custom_call.1} parent=1 // pred_region
      %s11 = ssub.s32 512, 512
      %12 = vsyncadd [#allocation3], %s11
      %s13 = sshll.u32 [#allocation2], 4
      %s14 = int_to_ptr.vmem [resolvable:$true] %s13
      %19 = dma.hbm_to_vmem [thread:$0]  %s0, 512, %s14, [#allocation3], 256, 256, 16
    $region5: #{tpu_custom_call.1} parent=1 // pred_fallthru
      _
    // Predicated region
    $region6: #{tpu_custom_call.1} parent=1 // pred_check
      _
    $region7: #{tpu_custom_call.1} parent=1 // pred_check_branch
      %21 = sbr.rel (0) target = $region9
    $region8: #{tpu_custom_call.1} parent=1 // pred_region
      %22 = dma.done [#allocation3], 512
    $region9: #{tpu_custom_call.1} parent=1 // pred_fallthru
      _
    %v23 = vld [vmem:[#allocation2] sm:$0xff]
    %v24 = vld [vmem:[#allocation2 + $0x8] sm:$0xff]
    %v25 = vld [vmem:[#allocation2 + $0x10] sm:$0xff]
    %v26 = vld [vmem:[#allocation2 + $0x18] sm:$0xff]
    %v27 = vmul.f32 %v23, %v23
    %v28 = vmul.f32 %v24, %v24
    %v29 = vmul.f32 %v25, %v25
    %v30 = vmul.f32 %v26, %v26
    %v31 = vadd.f32 %v27, %v28
    %32 = vadd.xlane.f32.xlu0 %v31
    %v33 = vpop.xlane.xlu0 %32
    %v34 = vadd.f32 %v29, %v30
    %35 = vadd.xlane.f32.xlu0 %v34
    %v36 = vpop.xlane.xlu0 %35
    %v37 = vmax.f32 %v33, 1e-24
    %v38 = vmax.f32 %v36, 1e-24
    %v39 = vrsqrt.pop %v37
    %v40 = vrsqrt.pop %v38
    %v41 = vmul.f32 %v23, %v39
    %v42 = vmul.f32 %v24, %v39
    %v43 = vmul.f32 %v25, %v40
    %v44 = vmul.f32 %v26, %v40
    %45 = vst [vmem:[#allocation5] sm:$0xff] %v41
    %46 = vst [vmem:[#allocation5 + $0x8] sm:$0xff] %v42
    %47 = vst [vmem:[#allocation5 + $0x10] sm:$0xff] %v43
    %48 = vst [vmem:[#allocation5 + $0x18] sm:$0xff] %v44
    // Predicated region
    $region10: #{tpu_custom_call.1} parent=1 // pred_check
      _
    $region11: #{tpu_custom_call.1} parent=1 // pred_check_branch
      %50 = sbr.rel (0) target = $region13
    $region12: #{tpu_custom_call.1} parent=1 // pred_region
      %s52 = ssub.s32 512, 512
      %53 = vsyncadd [#allocation4], %s52
      %s54 = sshll.u32 [#allocation5], 4
      %s55 = int_to_ptr.vmem [resolvable:$true] %s54
      %60 = dma.vmem_to_hbm [thread:$0]  %s55, 512, %s1, [#allocation4], 256, 256, 16
    $region13: #{tpu_custom_call.1} parent=1 // pred_fallthru
      _
    // Predicated region
    $region14: #{tpu_custom_call.1} parent=1 // pred_check
      _
    $region15: #{tpu_custom_call.1} parent=1 // pred_check_branch
      %62 = sbr.rel (0) target = $region17
    $region16: #{tpu_custom_call.1} parent=1 // pred_region
      %63 = dma.done [#allocation4], 512
    $region17: #{tpu_custom_call.1} parent=1 // pred_fallthru
      _
    %64 = vsyncpa [#allocation3], 1
    %65 = vsyncpa [#allocation4], 1

</llo_original>
